<compile_context>
chip_gen: v5e
topology: v5e:2x2
jax: 0.10.0
libtpu: 0.0.40
codegen_flags: <defaults>
</compile_context>

<pallas_src>
import jax
import jax.numpy as jnp
from jax.experimental import pallas as pl
from jax.experimental.pallas import tpu as pltpu


def _round_up(x, m):
    return int(pl.cdiv(x, m)) * m


# ----------------------------------------------------------------------------
# Kernel body: fused  fc1 -> ReLU -> (dropout=id) -> fc2 -> ReLU -> residual.
# ----------------------------------------------------------------------------
def mlp_botnec_kernel(x_ref, w1_ref, b1_ref, w2_ref, b2_ref, o_ref):
    x = x_ref[...]                                         # (tm, D) in dtype
    # fc1 + ReLU : MXU matmul (bf16 operands by default), f32 accumulate.
    h = jnp.dot(x.astype(w1_ref.dtype), w1_ref[...],
                preferred_element_type=jnp.float32)
    h = jnp.maximum(h + b1_ref[...], 0.0)
    # TODO(synk): nn.Dropout(p=0.05) is identity in eval/inference mode;
    # training-mode masking (pltpu.prng_seed/prng_random_bits + 1/(1-p)
    # rescale) is not implemented here.
    # fc2 + ReLU
    h2 = jnp.dot(h.astype(w2_ref.dtype), w2_ref[...],
                 preferred_element_type=jnp.float32)
    h2 = jnp.maximum(h2 + b2_ref[...], 0.0)
    # Residual add in f32, then cast to the output dtype.
    o_ref[...] = (x.astype(jnp.float32) + h2).astype(o_ref.dtype)


# ----------------------------------------------------------------------------
# One-time parameter packing (hoisted out of the per-call path).
# ----------------------------------------------------------------------------
def pack_mlp_botnec_params(w1, b1, w2, b2, *, use_bf16=True):
    """Pad H to a multiple of 128, cast weights to bf16.  Call ONCE and reuse.

    w1: [D, H] (== fc1.weight.T), b1: [H], w2: [H, D] (== fc2.weight.T), b2: [D]
    Padded hidden units see ReLU(0 + 0) = 0 and contribute nothing to fc2, so
    the math is exactly preserved.
    """
    D, H = w1.shape
    Hp = _round_up(H, 128)
    wd = jnp.bfloat16 if use_bf16 else w1.dtype
    w1p = jnp.zeros((D, Hp), wd).at[:, :H].set(w1.astype(wd))
    b1p = jnp.zeros((1, Hp), jnp.float32).at[0, :H].set(b1.astype(jnp.float32))
    w2p = jnp.zeros((Hp, D), wd).at[:H, :].set(w2.astype(wd))
    b2p = b2.astype(jnp.float32).reshape(1, D)
    return w1p, b1p, w2p, b2p


def _pick_tm(B, Hp, tm):
    B8 = _round_up(max(B, 1), 8)
    if tm is None:
        tm = min(512, B8)
        # Give the grid >= 2 steps once the batch is moderately large, so a
        # megacore part (v7x: 2 TensorCores) can shard the "parallel" axis.
        if B8 >= 256 and pl.cdiv(B8, tm) < 2:
            tm = _round_up(pl.cdiv(B8, 2), 8)
    # Bound the live f32 intermediate h (tm x Hp) to ~4 MiB so the VPU
    # bias/ReLU/cast epilogue stays spill-free.
    tm_cap = max(8, ((4 << 20) // (Hp * 4)) // 8 * 8)
    tm = max(8, min(int(tm), B8, tm_cap))
    return _round_up(tm, 8)


def _vmem_limit_bytes(tm, D, Hp, x_itemsize, w_itemsize):
    # Conservative working set (assumes double buffering everywhere).
    need = (2 * 2 * tm * D * x_itemsize       # x in + out tiles, double-buffered
            + 2 * (2 * D * Hp) * w_itemsize   # w1 + w2
            + 2 * (Hp + D) * 4                # biases (f32)
            + 2 * tm * Hp * 4                 # f32 intermediate + headroom
            + 2 * tm * D * 4)                 # f32 epilogue temporaries
    need = int(need * 1.25) + (4 << 20)
    try:
        cap = int(pltpu.get_tpu_info().vmem_capacity_bytes) - (8 << 20)
    except Exception:
        cap = 56 << 20                        # safe ceiling on every generation
    cap = max(cap, 32 << 20)
    return int(min(max(need, 16 << 20), cap))


# ----------------------------------------------------------------------------
# Kernel launcher (expects pre-packed params; no activation pad / out slice).
# ----------------------------------------------------------------------------
def mlp_botnec_packed(x, w1p, b1p, w2p, b2p, *, tm=None):
    """x: [B, D] (f32 or bf16); packed params from pack_mlp_botnec_params."""
    B, D = x.shape
    Dw, Hp = w1p.shape
    assert Dw == D and w2p.shape == (Hp, D)

    tm = _pick_tm(B, Hp, tm)
    grid = (int(pl.cdiv(B, tm)),)

    x_isz = jnp.dtype(x.dtype).itemsize
    w_isz = jnp.dtype(w1p.dtype).itemsize
    cost = pl.CostEstimate(
        flops=2 * B * (D * Hp + Hp * D),
        transcendentals=0,
        bytes_accessed=(2 * B * D * x_isz            # x in + out
                        + 2 * D * Hp * w_isz         # weights
                        + (Hp + D) * 4),             # biases
    )
    vmem_limit = _vmem_limit_bytes(tm, D, Hp, x_isz, w_isz)

    def call(weight_mode):
        kw = {} if weight_mode is None else {"pipeline_mode": weight_mode}
        grid_spec = pltpu.PrefetchScalarGridSpec(
            num_scalar_prefetch=0,
            grid=grid,
            in_specs=[
                pl.BlockSpec((tm, D), lambda i: (i, 0)),        # x (streamed)
                pl.BlockSpec((D, Hp), lambda i: (0, 0), **kw),  # w1 (resident)
                pl.BlockSpec((1, Hp), lambda i: (0, 0), **kw),  # b1
                pl.BlockSpec((Hp, D), lambda i: (0, 0), **kw),  # w2 (resident)
                pl.BlockSpec((1, D), lambda i: (0, 0), **kw),   # b2
            ],
            out_specs=pl.BlockSpec((tm, D), lambda i: (i, 0)),
        )
        return pl.pallas_call(
            mlp_botnec_kernel,
            out_shape=jax.ShapeDtypeStruct((B, D), x.dtype),
            grid_spec=grid_spec,
            compiler_params=pltpu.CompilerParams(
                dimension_semantics=("parallel",),
                vmem_limit_bytes=vmem_limit,
            ),
            cost_estimate=cost,
        )(x, w1p, b1p, w2p, b2p)

    buffered = getattr(pl, "Buffered", None)
    if buffered is not None:
        try:
            # Grid-invariant weight/bias blocks: single buffering halves their
            # VMEM residency (matters most on v7x's 64 MiB per TensorCore).
            return call(buffered(1))
        except Exception:
            pass  # fall back to default (2-deep) buffering
    return call(None)


def mlp_botnec(x, w1, b1, w2, b2, *, tm=None, use_bf16=True):
    """One-off convenience wrapper (packs params per call).

    For repeated calls, pack once with pack_mlp_botnec_params() and use
    mlp_botnec_packed() — that keeps the weight pad/cast off the hot path.
    """
    packed = pack_mlp_botnec_params(w1, b1, w2, b2, use_bf16=use_bf16)
    return mlp_botnec_packed(x, *packed, tm=tm)


# ----------------------------------------------------------------------------
# Pure-JAX references.
# ----------------------------------------------------------------------------
def mlp_botnec_ref(x, w1, b1, w2, b2, *, use_bf16=True):
    wd = jnp.bfloat16 if use_bf16 else w1.dtype
    h = jnp.dot(x.astype(wd), w1.astype(wd),
                preferred_element_type=jnp.float32) + b1
    h = jnp.maximum(h, 0.0)
    h2 = jnp.dot(h.astype(wd), w2.astype(wd),
                 preferred_element_type=jnp.float32) + b2
    h2 = jnp.maximum(h2, 0.0)
    return (x.astype(jnp.float32) + h2).astype(x.dtype)


def mlp_botnec_ref_f32(x, w1, b1, w2, b2):
    h = jnp.maximum(x @ w1 + b1, 0.0)
    h = jnp.maximum(h @ w2 + b2, 0.0)
    return x + h


if __name__ == "__main__":
    # Small shapes consistent with the module: input_dim=64, hidden_dim=192.
    B, D, H = 16, 64, 192
    key = jax.random.PRNGKey(0)
    kx, k1, k2, k3, k4 = jax.random.split(key, 5)

    x = jax.random.normal(kx, (B, D), dtype=jnp.float32)

    # Deterministic Kaiming-uniform-style init (matches nn.Linear bounds).
    bound1 = 1.0 / jnp.sqrt(D)
    w1 = jax.random.uniform(k1, (D, H), minval=-bound1, maxval=bound1,
                            dtype=jnp.float32)          # == fc1.weight.T
    b1 = jax.random.uniform(k2, (H,), minval=-bound1, maxval=bound1,
                            dtype=jnp.float32)
    bound2 = 1.0 / jnp.sqrt(H)
    w2 = jax.random.uniform(k3, (H, D), minval=-bound2, maxval=bound2,
                            dtype=jnp.float32)          # == fc2.weight.T
    b2 = jax.random.uniform(k4, (D,), minval=-bound2, maxval=bound2,
                            dtype=jnp.float32)

    # Pack weights ONCE (off the per-call path), then run the kernel.
    packed = pack_mlp_botnec_params(w1, b1, w2, b2, use_bf16=True)

    out = mlp_botnec_packed(x, *packed)
    out = jax.block_until_ready(out)
    assert out.shape == (B, D) and out.dtype == x.dtype

    # Exact-path check: reference with the same bf16 weight cast / f32 accum.
    ref_bf16 = mlp_botnec_ref(x, w1, b1, w2, b2, use_bf16=True)
    assert jnp.allclose(out, ref_bf16, atol=1e-3, rtol=1e-3), \
        "mismatch vs bf16-weight reference"

    # Semantic check: full-f32 reference (bf16 weight quantization tolerance).
    ref_f32 = mlp_botnec_ref_f32(x, w1, b1, w2, b2)
    assert jnp.allclose(out, ref_f32, atol=1e-1, rtol=1e-1), \
        "mismatch vs f32 reference"

    # Ragged batch: exercises the masked partial last block
    # (no wrapper-side x pad or output slice).
    B2 = 13
    x2 = jax.random.normal(jax.random.PRNGKey(1), (B2, D), dtype=jnp.float32)
    out2 = jax.block_until_ready(mlp_botnec_packed(x2, *packed))
    assert out2.shape == (B2, D)
    ref2 = mlp_botnec_ref(x2, w1, b1, w2, b2, use_bf16=True)
    assert jnp.allclose(out2, ref2, atol=1e-3, rtol=1e-3), \
        "mismatch on ragged batch"

    print("KERNEL_OK")
</pallas_src>

<mosaic_0001>
module attributes {stable_mosaic.version = 11 : i64} {
  func.func @mlp_botnec_kernel(%arg0: i32, %arg1: memref<16x64xf32, #tpu.memory_space<vmem>>, %arg2: memref<64x256xbf16, #tpu.memory_space<vmem>>, %arg3: memref<1x256xf32, #tpu.memory_space<vmem>>, %arg4: memref<256x64xbf16, #tpu.memory_space<vmem>>, %arg5: memref<1x64xf32, #tpu.memory_space<vmem>>, %arg6: memref<16x64xf32, #tpu.memory_space<vmem>>) attributes {dimension_semantics = [#tpu.dimension_semantics<parallel>], iteration_bounds = array<i64: 1>, scalar_prefetch = 0 : i64, scratch_operands = 0 : i64, tpu.core_type = #tpu.core_type<tc>, window_params = [{transform_indices = @transform_0, window_bounds = array<i64: 16, 64>}, {pipeline_mode = #tpu.pipeline_mode<synchronous>, transform_indices = @transform_1, window_bounds = array<i64: 64, 256>}, {pipeline_mode = #tpu.pipeline_mode<synchronous>, transform_indices = @transform_2, window_bounds = array<i64: 1, 256>}, {pipeline_mode = #tpu.pipeline_mode<synchronous>, transform_indices = @transform_3, window_bounds = array<i64: 256, 64>}, {pipeline_mode = #tpu.pipeline_mode<synchronous>, transform_indices = @transform_4, window_bounds = array<i64: 1, 64>}, {transform_indices = @transform_5, window_bounds = array<i64: 16, 64>}]} {
    %c0 = arith.constant 0 : index
    %c0_0 = arith.constant 0 : index
    %0 = vector.load %arg1[%c0, %c0_0] : memref<16x64xf32, #tpu.memory_space<vmem>>, vector<16x64xf32>
    %1 = arith.truncf %0 : vector<16x64xf32> to vector<16x64xbf16>
    %c0_1 = arith.constant 0 : index
    %c0_2 = arith.constant 0 : index
    %2 = vector.load %arg2[%c0_1, %c0_2] : memref<64x256xbf16, #tpu.memory_space<vmem>>, vector<64x256xbf16>
    %cst = arith.constant dense<0.000000e+00> : vector<16x256xf32>
    %3 = tpu.matmul %1, %2, %cst {dimension_numbers = #tpu.dot_dimension_numbers<[1], [0], [0], [1], [0, 0, 1, 1], [], []>} : vector<16x64xbf16>, vector<64x256xbf16>, vector<16x256xf32> -> vector<16x256xf32>
    %c0_3 = arith.constant 0 : index
    %c0_4 = arith.constant 0 : index
    %4 = vector.load %arg3[%c0_3, %c0_4] : memref<1x256xf32, #tpu.memory_space<vmem>>, vector<1x256xf32>
    %5 = vector.broadcast %4 : vector<1x256xf32> to vector<16x256xf32>
    %6 = arith.addf %3, %5 : vector<16x256xf32>
    %cst_5 = arith.constant 0.000000e+00 : f32
    %7 = vector.broadcast %cst_5 : f32 to vector<16x256xf32>
    %8 = arith.maximumf %6, %7 : vector<16x256xf32>
    %9 = arith.truncf %8 : vector<16x256xf32> to vector<16x256xbf16>
    %c0_6 = arith.constant 0 : index
    %c0_7 = arith.constant 0 : index
    %10 = vector.load %arg4[%c0_6, %c0_7] : memref<256x64xbf16, #tpu.memory_space<vmem>>, vector<256x64xbf16>
    %cst_8 = arith.constant dense<0.000000e+00> : vector<16x64xf32>
    %11 = tpu.matmul %9, %10, %cst_8 {dimension_numbers = #tpu.dot_dimension_numbers<[1], [0], [0], [1], [0, 0, 1, 1], [], []>} : vector<16x256xbf16>, vector<256x64xbf16>, vector<16x64xf32> -> vector<16x64xf32>
    %c0_9 = arith.constant 0 : index
    %c0_10 = arith.constant 0 : index
    %12 = vector.load %arg5[%c0_9, %c0_10] : memref<1x64xf32, #tpu.memory_space<vmem>>, vector<1x64xf32>
    %13 = vector.broadcast %12 : vector<1x64xf32> to vector<16x64xf32>
    %14 = arith.addf %11, %13 : vector<16x64xf32>
    %cst_11 = arith.constant 0.000000e+00 : f32
    %15 = vector.broadcast %cst_11 : f32 to vector<16x64xf32>
    %16 = arith.maximumf %14, %15 : vector<16x64xf32>
    %17 = arith.addf %0, %16 : vector<16x64xf32>
    %c0_12 = arith.constant 0 : index
    %c0_13 = arith.constant 0 : index
    %18 = vector.load %arg6[%c0_12, %c0_13] : memref<16x64xf32, #tpu.memory_space<vmem>>, vector<16x64xf32>
    tpu.vector_store %arg6[%c0_12, %c0_13], %17 {strides = array<i32>} : memref<16x64xf32, #tpu.memory_space<vmem>>, vector<16x64xf32>,
    return
  }
  func.func @transform_0(%arg0: i32) -> (i32, i32) {
    %c0_i32 = arith.constant 0 : i32
    %c0_i32_0 = arith.constant 0 : i32
    return %arg0, %c0_i32 : i32, i32
  }
  func.func @transform_1(%arg0: i32) -> (i32, i32) {
    %c0_i32 = arith.constant 0 : i32
    %c0_i32_0 = arith.constant 0 : i32
    %c0_i32_1 = arith.constant 0 : i32
    return %c0_i32, %c0_i32_0 : i32, i32
  }
  func.func @transform_2(%arg0: i32) -> (i32, i32) {
    %c0_i32 = arith.constant 0 : i32
    %c0_i32_0 = arith.constant 0 : i32
    %c0_i32_1 = arith.constant 0 : i32
    return %c0_i32, %c0_i32_0 : i32, i32
  }
  func.func @transform_3(%arg0: i32) -> (i32, i32) {
    %c0_i32 = arith.constant 0 : i32
    %c0_i32_0 = arith.constant 0 : i32
    %c0_i32_1 = arith.constant 0 : i32
    return %c0_i32, %c0_i32_0 : i32, i32
  }
  func.func @transform_4(%arg0: i32) -> (i32, i32) {
    %c0_i32 = arith.constant 0 : i32
    %c0_i32_0 = arith.constant 0 : i32
    %c0_i32_1 = arith.constant 0 : i32
    return %c0_i32, %c0_i32_0 : i32, i32
  }
  func.func @transform_5(%arg0: i32) -> (i32, i32) {
    %c0_i32 = arith.constant 0 : i32
    %c0_i32_0 = arith.constant 0 : i32
    return %arg0, %c0_i32 : i32, i32
  }
}

module attributes {stable_mosaic.version = 11 : i64} {
  func.func @mlp_botnec_kernel(%arg0: i32, %arg1: memref<16x64xf32, #tpu.memory_space<vmem>>, %arg2: memref<64x256xbf16, #tpu.memory_space<vmem>>, %arg3: memref<1x256xf32, #tpu.memory_space<vmem>>, %arg4: memref<256x64xbf16, #tpu.memory_space<vmem>>, %arg5: memref<1x64xf32, #tpu.memory_space<vmem>>, %arg6: memref<16x64xf32, #tpu.memory_space<vmem>>) attributes {dimension_semantics = [#tpu.dimension_semantics<parallel>], iteration_bounds = array<i64: 1>, scalar_prefetch = 0 : i64, scratch_operands = 0 : i64, tpu.core_type = #tpu.core_type<tc>, window_params = [{transform_indices = @transform_0, window_bounds = array<i64: 16, 64>}, {pipeline_mode = #tpu.pipeline_mode<synchronous>, transform_indices = @transform_1, window_bounds = array<i64: 64, 256>}, {pipeline_mode = #tpu.pipeline_mode<synchronous>, transform_indices = @transform_2, window_bounds = array<i64: 1, 256>}, {pipeline_mode = #tpu.pipeline_mode<synchronous>, transform_indices = @transform_3, window_bounds = array<i64: 256, 64>}, {pipeline_mode = #tpu.pipeline_mode<synchronous>, transform_indices = @transform_4, window_bounds = array<i64: 1, 64>}, {transform_indices = @transform_5, window_bounds = array<i64: 16, 64>}]} {
    %c0 = arith.constant 0 : index
    %c0_0 = arith.constant 0 : index
    %0 = vector.load %arg1[%c0, %c0_0] : memref<16x64xf32, #tpu.memory_space<vmem>>, vector<16x64xf32>
    %1 = arith.truncf %0 : vector<16x64xf32> to vector<16x64xbf16>
    %c0_1 = arith.constant 0 : index
    %c0_2 = arith.constant 0 : index
    %2 = vector.load %arg2[%c0_1, %c0_2] : memref<64x256xbf16, #tpu.memory_space<vmem>>, vector<64x256xbf16>
    %cst = arith.constant dense<0.000000e+00> : vector<16x256xf32>
    %3 = tpu.matmul %1, %2, %cst {dimension_numbers = #tpu.dot_dimension_numbers<[1], [0], [0], [1], [0, 0, 1, 1], [], []>} : vector<16x64xbf16>, vector<64x256xbf16>, vector<16x256xf32> -> vector<16x256xf32>
    %c0_3 = arith.constant 0 : index
    %c0_4 = arith.constant 0 : index
    %4 = vector.load %arg3[%c0_3, %c0_4] : memref<1x256xf32, #tpu.memory_space<vmem>>, vector<1x256xf32>
    %5 = vector.broadcast %4 : vector<1x256xf32> to vector<16x256xf32>
    %6 = arith.addf %3, %5 : vector<16x256xf32>
    %cst_5 = arith.constant 0.000000e+00 : f32
    %7 = vector.broadcast %cst_5 : f32 to vector<16x256xf32>
    %8 = arith.maximumf %6, %7 : vector<16x256xf32>
    %9 = arith.truncf %8 : vector<16x256xf32> to vector<16x256xbf16>
    %c0_6 = arith.constant 0 : index
    %c0_7 = arith.constant 0 : index
    %10 = vector.load %arg4[%c0_6, %c0_7] : memref<256x64xbf16, #tpu.memory_space<vmem>>, vector<256x64xbf16>
    %cst_8 = arith.constant dense<0.000000e+00> : vector<16x64xf32>
    %11 = tpu.matmul %9, %10, %cst_8 {dimension_numbers = #tpu.dot_dimension_numbers<[1], [0], [0], [1], [0, 0, 1, 1], [], []>} : vector<16x256xbf16>, vector<256x64xbf16>, vector<16x64xf32> -> vector<16x64xf32>
    %c0_9 = arith.constant 0 : index
    %c0_10 = arith.constant 0 : index
    %12 = vector.load %arg5[%c0_9, %c0_10] : memref<1x64xf32, #tpu.memory_space<vmem>>, vector<1x64xf32>
    %13 = vector.broadcast %12 : vector<1x64xf32> to vector<16x64xf32>
    %14 = arith.addf %11, %13 : vector<16x64xf32>
    %cst_11 = arith.constant 0.000000e+00 : f32
    %15 = vector.broadcast %cst_11 : f32 to vector<16x64xf32>
    %16 = arith.maximumf %14, %15 : vector<16x64xf32>
    %17 = arith.addf %0, %16 : vector<16x64xf32>
    %c0_12 = arith.constant 0 : index
    %c0_13 = arith.constant 0 : index
    %18 = vector.load %arg6[%c0_12, %c0_13] : memref<16x64xf32, #tpu.memory_space<vmem>>, vector<16x64xf32>
    tpu.vector_store %arg6[%c0_12, %c0_13], %17 {strides = array<i32>} : memref<16x64xf32, #tpu.memory_space<vmem>>, vector<16x64xf32>,
    return
  }
  func.func @transform_0(%arg0: i32) -> (i32, i32) {
    %c0_i32 = arith.constant 0 : i32
    %c0_i32_0 = arith.constant 0 : i32
    return %arg0, %c0_i32 : i32, i32
  }
  func.func @transform_1(%arg0: i32) -> (i32, i32) {
    %c0_i32 = arith.constant 0 : i32
    %c0_i32_0 = arith.constant 0 : i32
    %c0_i32_1 = arith.constant 0 : i32
    return %c0_i32, %c0_i32_0 : i32, i32
  }
  func.func @transform_2(%arg0: i32) -> (i32, i32) {
    %c0_i32 = arith.constant 0 : i32
    %c0_i32_0 = arith.constant 0 : i32
    %c0_i32_1 = arith.constant 0 : i32
    return %c0_i32, %c0_i32_0 : i32, i32
  }
  func.func @transform_3(%arg0: i32) -> (i32, i32) {
    %c0_i32 = arith.constant 0 : i32
    %c0_i32_0 = arith.constant 0 : i32
    %c0_i32_1 = arith.constant 0 : i32
    return %c0_i32, %c0_i32_0 : i32, i32
  }
  func.func @transform_4(%arg0: i32) -> (i32, i32) {
    %c0_i32 = arith.constant 0 : i32
    %c0_i32_0 = arith.constant 0 : i32
    %c0_i32_1 = arith.constant 0 : i32
    return %c0_i32, %c0_i32_0 : i32, i32
  }
  func.func @transform_5(%arg0: i32) -> (i32, i32) {
    %c0_i32 = arith.constant 0 : i32
    %c0_i32_0 = arith.constant 0 : i32
    return %arg0, %c0_i32 : i32, i32
  }
}

</mosaic_0001>

<llo_original>
// kernel: tpu_custom_call.1
$region0: #{tpu_custom_call.1}
  #allocation0 [shape = 'u32[]', space=smem, size = 0x4, offset = 0x4, fixed_abs, tag = 'smem constant byte address 0x4 - core index']
  #allocation1 [shape = 'u32[72,128]{1,0:T(1,128)}', space=vmem, size = 0x9000, scoped, tag = 'internal scratch']
  %s0 = inlined_call_operand.vmem [shape: f32[16,64], index: 0, kind: input, shape index: {}]
  %s1 = inlined_call_operand.vmem [shape: bf16[64,256], index: 1, kind: input, shape index: {}]
  %s2 = inlined_call_operand.vmem [shape: f32[1,256], index: 2, kind: input, shape index: {}]
  %s3 = inlined_call_operand.vmem [shape: bf16[256,64], index: 3, kind: input, shape index: {}]
  %s4 = inlined_call_operand.vmem [shape: f32[1,64], index: 4, kind: input, shape index: {}]
  %s5 = inlined_call_operand.hbm [shape: f32[16,64], index: 5, kind: output, shape index: {}]
  %s6 = sld [smem:[#allocation0]]
  $region30: #{tpu_custom_call.1} parent=0
    _
  %s8 = ssub.s32 1, %s6
  %s9 = scalar_select 0, %s8, %s6
  $region1: #{tpu_custom_call.1} parent=0
    #allocation2 [shape = 'u8[8192]{0}', space=vmem, size = 0x2000, scoped, tag = 'output window, operand 0, single buffered']
    #allocation3 [shape = 's32[1]{0}', space=sflag, size = 0x4, scoped, tag = 'scoped memory for tpu_custom_call.1']
    %10 = vsyncpa [#allocation3], 0
    // Predicated region
    $region2: #{tpu_custom_call.1} parent=1 // pred_check
      _
    $region3: #{tpu_custom_call.1} parent=1 // pred_check_branch
      %12 = sbr.rel (0) target = $region5
    $region4: #{tpu_custom_call.1} parent=1 // pred_region
      _
    $region5: #{tpu_custom_call.1} parent=1 // pred_fallthru
      _
    // Predicated region
    $region6: #{tpu_custom_call.1} parent=1 // pred_check
      _
    $region7: #{tpu_custom_call.1} parent=1 // pred_check_branch
      %14 = sbr.rel (0) target = $region9
    $region8: #{tpu_custom_call.1} parent=1 // pred_region
      _
    $region9: #{tpu_custom_call.1} parent=1 // pred_fallthru
      _
    // Predicated region
    $region10: #{tpu_custom_call.1} parent=1 // pred_check
      _
    $region11: #{tpu_custom_call.1} parent=1 // pred_check_branch
      %16 = sbr.rel (0) target = $region13
    $region12: #{tpu_custom_call.1} parent=1 // pred_region
      _
    $region13: #{tpu_custom_call.1} parent=1 // pred_fallthru
      _
    // Predicated region
    $region14: #{tpu_custom_call.1} parent=1 // pred_check
      _
    $region15: #{tpu_custom_call.1} parent=1 // pred_check_branch
      %18 = sbr.rel (0) target = $region17
    $region16: #{tpu_custom_call.1} parent=1 // pred_region
      _
    $region17: #{tpu_custom_call.1} parent=1 // pred_fallthru
      _
    // Predicated region
    $region18: #{tpu_custom_call.1} parent=1 // pred_check
      _
    $region19: #{tpu_custom_call.1} parent=1 // pred_check_branch
      %20 = sbr.rel (0) target = $region21
    $region20: #{tpu_custom_call.1} parent=1 // pred_region
      _
    $region21: #{tpu_custom_call.1} parent=1 // pred_fallthru
      _
    %v22 = vld [vmem:[%s0] sm:$0xff]
    %v23 = vld [vmem:[%s0 + $0x8] sm:$0xff]
    %v24 = vpack.c.bf16 %v23, %v22
    %v25 = vld [vmem:[%s1] sm:$0xff]
    %v26 = vld [vmem:[%s1 + $0x8] sm:$0xff]
    %v27 = vld [vmem:[%s1 + $0x10] sm:$0xff]
    %v28 = vld [vmem:[%s1 + $0x18] sm:$0xff]
    %v29 = vld [vmem:[%s1 + $0x20] sm:$0xff]
    %v30 = vld [vmem:[%s1 + $0x28] sm:$0xff]
    %v31 = vld [vmem:[%s1 + $0x30] sm:$0xff]
    %v32 = vld [vmem:[%s1 + $0x38] sm:$0xff]
    %v33 = vld [vmem:[%s2] sm:$0x3]
    %v35 = vperm.slane %v33, 0
    %v36 = vperm.slane %v33, 1
    %v47 = vunpack.c.l.b16 %v25
    %v48 = vunpack.c.h.b16 %v25
    %v49 = vunpack.c.l.b16 %v26
    %v50 = vunpack.c.h.b16 %v26
    %v51 = vunpack.c.l.b16 %v27
    %v52 = vunpack.c.h.b16 %v27
    %v53 = vunpack.c.l.b16 %v28
    %v54 = vunpack.c.h.b16 %v28
    %v55 = vunpack.c.l.b16 %v29
    %v56 = vunpack.c.h.b16 %v29
    %v57 = vunpack.c.l.b16 %v30
    %v58 = vunpack.c.h.b16 %v30
    %v59 = vunpack.c.l.b16 %v31
    %v60 = vunpack.c.h.b16 %v31
    %v61 = vunpack.c.l.b16 %v32
    %v62 = vunpack.c.h.b16 %v32
    %v63 = vpack.c.b16 %v49, %v47
    %v64 = vpack.c.b16 %v50, %v48
    %v65 = vpack.c.b16 %v53, %v51
    %v66 = vpack.c.b16 %v54, %v52
    %v67 = vpack.c.b16 %v57, %v55
    %v68 = vpack.c.b16 %v58, %v56
    %v69 = vpack.c.b16 %v61, %v59
    %v70 = vpack.c.b16 %v62, %v60
    %vm79 = vcmask 523264
    %v81 = vsel %vm79, %v24, 0
    %83 = vmatpush.bf16.msra.mxu0 0
    %84 = vmatpush.bf16.msra.mxu0 0
    %85 = vmatpush.bf16.msra.mxu0 0
    %86 = vmatpush.bf16.msra.mxu0 0
    %87 = vmatpush.bf16.msra.mxu0 %v69
    %88 = vmatpush.bf16.msra.mxu0 %v67
    %89 = vmatpush.bf16.msra.mxu0 %v65
    %90 = vmatpush.bf16.msra.mxu0 %v63
    %91 = vmatmul.bf16.gmra.mxu0 %v81
    %v92 = vpop.f32.mrf.mxu0
    %v93 = vadd.f32 %v35, %v92
    %v94 = vpop.f32.mrf.mxu0
    %v95 = vadd.f32 %v35, %v94
    %96 = vdwg.mxu0
    %97 = vmatpush.bf16.msra.mxu0 0
    %98 = vmatpush.bf16.msra.mxu0 0
    %99 = vmatpush.bf16.msra.mxu0 0
    %100 = vmatpush.bf16.msra.mxu0 0
    %101 = vmatpush.bf16.msra.mxu0 %v70
    %102 = vmatpush.bf16.msra.mxu0 %v68
    %103 = vmatpush.bf16.msra.mxu0 %v66
    %104 = vmatpush.bf16.msra.mxu0 %v64
    %105 = vmatmul.bf16.gmra.mxu0 %v81
    %v106 = vpop.f32.mrf.mxu0
    %v107 = vadd.f32 %v36, %v106
    %v108 = vpop.f32.mrf.mxu0
    %v109 = vadd.f32 %v36, %v108
    %110 = vdwg.mxu0
    %v111 = vmax.f32 %v93, 0.0
    %v112 = vmax.f32 %v107, 0.0
    %v113 = vmax.f32 %v95, 0.0
    %v114 = vmax.f32 %v109, 0.0
    %v115 = vpack.c.bf16 %v113, %v111
    %v116 = vpack.c.bf16 %v114, %v112
    %v117 = vld [vmem:[%s3] sm:$0xf]
    %v118 = vld [vmem:[%s3 + $0x4] sm:$0xf]
    %v119 = vld [vmem:[%s3 + $0x8] sm:$0xf]
    %v120 = vld [vmem:[%s3 + $0xc] sm:$0xf]
    %v121 = vld [vmem:[%s3 + $0x10] sm:$0xf]
    %v122 = vld [vmem:[%s3 + $0x14] sm:$0xf]
    %v123 = vld [vmem:[%s3 + $0x18] sm:$0xf]
    %v124 = vld [vmem:[%s3 + $0x1c] sm:$0xf]
    %v125 = vld [vmem:[%s3 + $0x20] sm:$0xf]
    %v126 = vld [vmem:[%s3 + $0x24] sm:$0xf]
    %v127 = vld [vmem:[%s3 + $0x28] sm:$0xf]
    %v128 = vld [vmem:[%s3 + $0x2c] sm:$0xf]
    %v129 = vld [vmem:[%s3 + $0x30] sm:$0xf]
    %v130 = vld [vmem:[%s3 + $0x34] sm:$0xf]
    %v131 = vld [vmem:[%s3 + $0x38] sm:$0xf]
    %v132 = vld [vmem:[%s3 + $0x3c] sm:$0xf]
    %v133 = vld [vmem:[%s3 + $0x40] sm:$0xf]
    %v134 = vld [vmem:[%s3 + $0x44] sm:$0xf]
    %v135 = vld [vmem:[%s3 + $0x48] sm:$0xf]
    %v136 = vld [vmem:[%s3 + $0x4c] sm:$0xf]
    %v137 = vld [vmem:[%s3 + $0x50] sm:$0xf]
    %v138 = vld [vmem:[%s3 + $0x54] sm:$0xf]
    %v139 = vld [vmem:[%s3 + $0x58] sm:$0xf]
    %v140 = vld [vmem:[%s3 + $0x5c] sm:$0xf]
    %v141 = vld [vmem:[%s3 + $0x60] sm:$0xf]
    %v142 = vld [vmem:[%s3 + $0x64] sm:$0xf]
    %v143 = vld [vmem:[%s3 + $0x68] sm:$0xf]
    %v144 = vld [vmem:[%s3 + $0x6c] sm:$0xf]
    %v145 = vld [vmem:[%s3 + $0x70] sm:$0xf]
    %v146 = vld [vmem:[%s3 + $0x74] sm:$0xf]
    %v147 = vld [vmem:[%s3 + $0x78] sm:$0xf]
    %v148 = vld [vmem:[%s3 + $0x7c] sm:$0xf]
    %v149 = vld [vmem:[%s4] sm:$0x1]
    %v151 = vperm.slane %v149, 0
    %v185 = vunpack.c.l.b16 %v117
    %v186 = vunpack.c.l.b16 %v118
    %v187 = vunpack.c.l.b16 %v119
    %v188 = vunpack.c.l.b16 %v120
    %v189 = vunpack.c.l.b16 %v121
    %v190 = vunpack.c.l.b16 %v122
    %v191 = vunpack.c.l.b16 %v123
    %v192 = vunpack.c.l.b16 %v124
    %v193 = vunpack.c.l.b16 %v125
    %v194 = vunpack.c.l.b16 %v126
    %v195 = vunpack.c.l.b16 %v127
    %v196 = vunpack.c.l.b16 %v128
    %v197 = vunpack.c.l.b16 %v129
    %v198 = vunpack.c.l.b16 %v130
    %v199 = vunpack.c.l.b16 %v131
    %v200 = vunpack.c.l.b16 %v132
    %v201 = vunpack.c.l.b16 %v133
    %v202 = vunpack.c.l.b16 %v134
    %v203 = vunpack.c.l.b16 %v135
    %v204 = vunpack.c.l.b16 %v136
    %v205 = vunpack.c.l.b16 %v137
    %v206 = vunpack.c.l.b16 %v138
    %v207 = vunpack.c.l.b16 %v139
    %v208 = vunpack.c.l.b16 %v140
    %v209 = vunpack.c.l.b16 %v141
    %v210 = vunpack.c.l.b16 %v142
    %v211 = vunpack.c.l.b16 %v143
    %v212 = vunpack.c.l.b16 %v144
    %v213 = vunpack.c.l.b16 %v145
    %v214 = vunpack.c.l.b16 %v146
    %v215 = vunpack.c.l.b16 %v147
    %v216 = vunpack.c.l.b16 %v148
    %v217 = vpack.c.b16 %v186, %v185
    %v218 = vpack.c.b16 %v188, %v187
    %v219 = vpack.c.b16 %v190, %v189
    %v220 = vpack.c.b16 %v192, %v191
    %v221 = vpack.c.b16 %v194, %v193
    %v222 = vpack.c.b16 %v196, %v195
    %v223 = vpack.c.b16 %v198, %v197
    %v224 = vpack.c.b16 %v200, %v199
    %v225 = vpack.c.b16 %v202, %v201
    %v226 = vpack.c.b16 %v204, %v203
    %v227 = vpack.c.b16 %v206, %v205
    %v228 = vpack.c.b16 %v208, %v207
    %v229 = vpack.c.b16 %v210, %v209
    %v230 = vpack.c.b16 %v212, %v211
    %v231 = vpack.c.b16 %v214, %v213
    %v232 = vpack.c.b16 %v216, %v215
    %249 = vmatpush.bf16.msra.mxu0 %v224
    %250 = vmatpush.bf16.msra.mxu0 %v223
    %251 = vmatpush.bf16.msra.mxu0 %v222
    %252 = vmatpush.bf16.msra.mxu0 %v221
    %253 = vmatpush.bf16.msra.mxu0 %v220
    %254 = vmatpush.bf16.msra.mxu0 %v219
    %255 = vmatpush.bf16.msra.mxu0 %v218
    %256 = vmatpush.bf16.msra.mxu0 %v217
    %257 = vmatmul.bf16.gmra.mxu0 %v115
    %v258 = vpop.f32.mrf.mxu0
    %v259 = vadd.f32 %v151, %v258
    %v260 = vpop.f32.mrf.mxu0
    %v261 = vadd.f32 %v151, %v260
    %262 = vdwg.mxu0
    %263 = vmatpush.bf16.msra.mxu0 %v232
    %264 = vmatpush.bf16.msra.mxu0 %v231
    %265 = vmatpush.bf16.msra.mxu0 %v230
    %266 = vmatpush.bf16.msra.mxu0 %v229
    %267 = vmatpush.bf16.msra.mxu0 %v228
    %268 = vmatpush.bf16.msra.mxu0 %v227
    %269 = vmatpush.bf16.msra.mxu0 %v226
    %270 = vmatpush.bf16.msra.mxu0 %v225
    %271 = vmatmul.bf16.gmra.mxu0 %v116
    %v272 = vpop.f32.mrf.mxu0
    %v273 = vadd.f32 %v259, %v272
    %v274 = vpop.f32.mrf.mxu0
    %v275 = vadd.f32 %v261, %v274
    %276 = vdwg.mxu0
    %v277 = vmax.f32 %v273, 0.0
    %v278 = vmax.f32 %v275, 0.0
    %v279 = vadd.f32 %v22, %v277
    %v280 = vadd.f32 %v23, %v278
    %281 = vst.msk [vmem:[#allocation2] sm:$0xff] %vm79, %v279
    %282 = vst.msk [vmem:[#allocation2 + $0x8] sm:$0xff] %vm79, %v280
    // Predicated region
    $region22: #{tpu_custom_call.1} parent=1 // pred_check
      _
    $region23: #{tpu_custom_call.1} parent=1 // pred_check_branch
      %284 = sbr.rel (0) target = $region25
    $region24: #{tpu_custom_call.1} parent=1 // pred_region
      %286 = vsyncadd [#allocation3], 0
      %s287 = sshll.u32 [#allocation2], 4
      %s288 = int_to_ptr.vmem [resolvable:$true] %s287
      %s289 = sshll.u32 %s5, 4
      %s290 = int_to_ptr.hbm [resolvable:$true] %s289
      %295 = dma.vmem_to_hbm [thread:$0]  %s288, 256, %s290, [#allocation3], 128, 128, 8
    $region25: #{tpu_custom_call.1} parent=1 // pred_fallthru
      _
    // Predicated region
    $region26: #{tpu_custom_call.1} parent=1 // pred_check
      _
    $region27: #{tpu_custom_call.1} parent=1 // pred_check_branch
      %297 = sbr.rel (0) target = $region29
    $region28: #{tpu_custom_call.1} parent=1 // pred_region
      %299 = dma.done [#allocation3], 256
    $region29: #{tpu_custom_call.1} parent=1 // pred_fallthru
      _
    %300 = vsyncpa [#allocation3], 1

// kernel: tpu_custom_call.1
$region0: #{tpu_custom_call.1}
  #allocation0 [shape = 'u32[]', space=smem, size = 0x4, offset = 0x4, fixed_abs, tag = 'smem constant byte address 0x4 - core index']
  #allocation1 [shape = 'u32[72,128]{1,0:T(1,128)}', space=vmem, size = 0x9000, scoped, tag = 'internal scratch']
  %s0 = inlined_call_operand.vmem [shape: f32[16,64], index: 0, kind: input, shape index: {}]
  %s1 = inlined_call_operand.vmem [shape: bf16[64,256], index: 1, kind: input, shape index: {}]
  %s2 = inlined_call_operand.vmem [shape: f32[1,256], index: 2, kind: input, shape index: {}]
  %s3 = inlined_call_operand.vmem [shape: bf16[256,64], index: 3, kind: input, shape index: {}]
  %s4 = inlined_call_operand.vmem [shape: f32[1,64], index: 4, kind: input, shape index: {}]
  %s5 = inlined_call_operand.hbm [shape: f32[16,64], index: 5, kind: output, shape index: {}]
  %s6 = sld [smem:[#allocation0]]
  $region30: #{tpu_custom_call.1} parent=0
    _
  %s8 = ssub.s32 1, %s6
  %s9 = scalar_select 0, %s8, %s6
  $region1: #{tpu_custom_call.1} parent=0
    #allocation2 [shape = 'u8[8192]{0}', space=vmem, size = 0x2000, scoped, tag = 'output window, operand 0, single buffered']
    #allocation3 [shape = 's32[1]{0}', space=sflag, size = 0x4, scoped, tag = 'scoped memory for tpu_custom_call.1']
    %10 = vsyncpa [#allocation3], 0
    // Predicated region
    $region2: #{tpu_custom_call.1} parent=1 // pred_check
      _
    $region3: #{tpu_custom_call.1} parent=1 // pred_check_branch
      %12 = sbr.rel (0) target = $region5
    $region4: #{tpu_custom_call.1} parent=1 // pred_region
      _
    $region5: #{tpu_custom_call.1} parent=1 // pred_fallthru
      _
    // Predicated region
    $region6: #{tpu_custom_call.1} parent=1 // pred_check
      _
    $region7: #{tpu_custom_call.1} parent=1 // pred_check_branch
      %14 = sbr.rel (0) target = $region9
    $region8: #{tpu_custom_call.1} parent=1 // pred_region
      _
    $region9: #{tpu_custom_call.1} parent=1 // pred_fallthru
      _
    // Predicated region
    $region10: #{tpu_custom_call.1} parent=1 // pred_check
      _
    $region11: #{tpu_custom_call.1} parent=1 // pred_check_branch
      %16 = sbr.rel (0) target = $region13
    $region12: #{tpu_custom_call.1} parent=1 // pred_region
      _
    $region13: #{tpu_custom_call.1} parent=1 // pred_fallthru
      _
    // Predicated region
    $region14: #{tpu_custom_call.1} parent=1 // pred_check
      _
    $region15: #{tpu_custom_call.1} parent=1 // pred_check_branch
      %18 = sbr.rel (0) target = $region17
    $region16: #{tpu_custom_call.1} parent=1 // pred_region
      _
    $region17: #{tpu_custom_call.1} parent=1 // pred_fallthru
      _
    // Predicated region
    $region18: #{tpu_custom_call.1} parent=1 // pred_check
      _
    $region19: #{tpu_custom_call.1} parent=1 // pred_check_branch
      %20 = sbr.rel (0) target = $region21
    $region20: #{tpu_custom_call.1} parent=1 // pred_region
      _
    $region21: #{tpu_custom_call.1} parent=1 // pred_fallthru
      _
    %v22 = vld [vmem:[%s0] sm:$0xff]
    %v23 = vld [vmem:[%s0 + $0x8] sm:$0xff]
    %v24 = vpack.c.bf16 %v23, %v22
    %v25 = vld [vmem:[%s1] sm:$0xff]
    %v26 = vld [vmem:[%s1 + $0x8] sm:$0xff]
    %v27 = vld [vmem:[%s1 + $0x10] sm:$0xff]
    %v28 = vld [vmem:[%s1 + $0x18] sm:$0xff]
    %v29 = vld [vmem:[%s1 + $0x20] sm:$0xff]
    %v30 = vld [vmem:[%s1 + $0x28] sm:$0xff]
    %v31 = vld [vmem:[%s1 + $0x30] sm:$0xff]
    %v32 = vld [vmem:[%s1 + $0x38] sm:$0xff]
    %v33 = vld [vmem:[%s2] sm:$0x3]
    %v35 = vperm.slane %v33, 0
    %v36 = vperm.slane %v33, 1
    %v47 = vunpack.c.l.b16 %v25
    %v48 = vunpack.c.h.b16 %v25
    %v49 = vunpack.c.l.b16 %v26
    %v50 = vunpack.c.h.b16 %v26
    %v51 = vunpack.c.l.b16 %v27
    %v52 = vunpack.c.h.b16 %v27
    %v53 = vunpack.c.l.b16 %v28
    %v54 = vunpack.c.h.b16 %v28
    %v55 = vunpack.c.l.b16 %v29
    %v56 = vunpack.c.h.b16 %v29
    %v57 = vunpack.c.l.b16 %v30
    %v58 = vunpack.c.h.b16 %v30
    %v59 = vunpack.c.l.b16 %v31
    %v60 = vunpack.c.h.b16 %v31
    %v61 = vunpack.c.l.b16 %v32
    %v62 = vunpack.c.h.b16 %v32
    %v63 = vpack.c.b16 %v49, %v47
    %v64 = vpack.c.b16 %v50, %v48
    %v65 = vpack.c.b16 %v53, %v51
    %v66 = vpack.c.b16 %v54, %v52
    %v67 = vpack.c.b16 %v57, %v55
    %v68 = vpack.c.b16 %v58, %v56
    %v69 = vpack.c.b16 %v61, %v59
    %v70 = vpack.c.b16 %v62, %v60
    %vm79 = vcmask 523264
    %v81 = vsel %vm79, %v24, 0
    %83 = vmatpush.bf16.msra.mxu0 0
    %84 = vmatpush.bf16.msra.mxu0 0
    %85 = vmatpush.bf16.msra.mxu0 0
    %86 = vmatpush.bf16.msra.mxu0 0
    %87 = vmatpush.bf16.msra.mxu0 %v69
    %88 = vmatpush.bf16.msra.mxu0 %v67
    %89 = vmatpush.bf16.msra.mxu0 %v65
    %90 = vmatpush.bf16.msra.mxu0 %v63
    %91 = vmatmul.bf16.gmra.mxu0 %v81
    %v92 = vpop.f32.mrf.mxu0
    %v93 = vadd.f32 %v35, %v92
    %v94 = vpop.f32.mrf.mxu0
    %v95 = vadd.f32 %v35, %v94
    %96 = vdwg.mxu0
    %97 = vmatpush.bf16.msra.mxu0 0
    %98 = vmatpush.bf16.msra.mxu0 0
    %99 = vmatpush.bf16.msra.mxu0 0
    %100 = vmatpush.bf16.msra.mxu0 0
    %101 = vmatpush.bf16.msra.mxu0 %v70
    %102 = vmatpush.bf16.msra.mxu0 %v68
    %103 = vmatpush.bf16.msra.mxu0 %v66
    %104 = vmatpush.bf16.msra.mxu0 %v64
    %105 = vmatmul.bf16.gmra.mxu0 %v81
    %v106 = vpop.f32.mrf.mxu0
    %v107 = vadd.f32 %v36, %v106
    %v108 = vpop.f32.mrf.mxu0
    %v109 = vadd.f32 %v36, %v108
    %110 = vdwg.mxu0
    %v111 = vmax.f32 %v93, 0.0
    %v112 = vmax.f32 %v107, 0.0
    %v113 = vmax.f32 %v95, 0.0
    %v114 = vmax.f32 %v109, 0.0
    %v115 = vpack.c.bf16 %v113, %v111
    %v116 = vpack.c.bf16 %v114, %v112
    %v117 = vld [vmem:[%s3] sm:$0xf]
    %v118 = vld [vmem:[%s3 + $0x4] sm:$0xf]
    %v119 = vld [vmem:[%s3 + $0x8] sm:$0xf]
    %v120 = vld [vmem:[%s3 + $0xc] sm:$0xf]
    %v121 = vld [vmem:[%s3 + $0x10] sm:$0xf]
    %v122 = vld [vmem:[%s3 + $0x14] sm:$0xf]
    %v123 = vld [vmem:[%s3 + $0x18] sm:$0xf]
    %v124 = vld [vmem:[%s3 + $0x1c] sm:$0xf]
    %v125 = vld [vmem:[%s3 + $0x20] sm:$0xf]
    %v126 = vld [vmem:[%s3 + $0x24] sm:$0xf]
    %v127 = vld [vmem:[%s3 + $0x28] sm:$0xf]
    %v128 = vld [vmem:[%s3 + $0x2c] sm:$0xf]
    %v129 = vld [vmem:[%s3 + $0x30] sm:$0xf]
    %v130 = vld [vmem:[%s3 + $0x34] sm:$0xf]
    %v131 = vld [vmem:[%s3 + $0x38] sm:$0xf]
    %v132 = vld [vmem:[%s3 + $0x3c] sm:$0xf]
    %v133 = vld [vmem:[%s3 + $0x40] sm:$0xf]
    %v134 = vld [vmem:[%s3 + $0x44] sm:$0xf]
    %v135 = vld [vmem:[%s3 + $0x48] sm:$0xf]
    %v136 = vld [vmem:[%s3 + $0x4c] sm:$0xf]
    %v137 = vld [vmem:[%s3 + $0x50] sm:$0xf]
    %v138 = vld [vmem:[%s3 + $0x54] sm:$0xf]
    %v139 = vld [vmem:[%s3 + $0x58] sm:$0xf]
    %v140 = vld [vmem:[%s3 + $0x5c] sm:$0xf]
    %v141 = vld [vmem:[%s3 + $0x60] sm:$0xf]
    %v142 = vld [vmem:[%s3 + $0x64] sm:$0xf]
    %v143 = vld [vmem:[%s3 + $0x68] sm:$0xf]
    %v144 = vld [vmem:[%s3 + $0x6c] sm:$0xf]
    %v145 = vld [vmem:[%s3 + $0x70] sm:$0xf]
    %v146 = vld [vmem:[%s3 + $0x74] sm:$0xf]
    %v147 = vld [vmem:[%s3 + $0x78] sm:$0xf]
    %v148 = vld [vmem:[%s3 + $0x7c] sm:$0xf]
    %v149 = vld [vmem:[%s4] sm:$0x1]
    %v151 = vperm.slane %v149, 0
    %v185 = vunpack.c.l.b16 %v117
    %v186 = vunpack.c.l.b16 %v118
    %v187 = vunpack.c.l.b16 %v119
    %v188 = vunpack.c.l.b16 %v120
    %v189 = vunpack.c.l.b16 %v121
    %v190 = vunpack.c.l.b16 %v122
    %v191 = vunpack.c.l.b16 %v123
    %v192 = vunpack.c.l.b16 %v124
    %v193 = vunpack.c.l.b16 %v125
    %v194 = vunpack.c.l.b16 %v126
    %v195 = vunpack.c.l.b16 %v127
    %v196 = vunpack.c.l.b16 %v128
    %v197 = vunpack.c.l.b16 %v129
    %v198 = vunpack.c.l.b16 %v130
    %v199 = vunpack.c.l.b16 %v131
    %v200 = vunpack.c.l.b16 %v132
    %v201 = vunpack.c.l.b16 %v133
    %v202 = vunpack.c.l.b16 %v134
    %v203 = vunpack.c.l.b16 %v135
    %v204 = vunpack.c.l.b16 %v136
    %v205 = vunpack.c.l.b16 %v137
    %v206 = vunpack.c.l.b16 %v138
    %v207 = vunpack.c.l.b16 %v139
    %v208 = vunpack.c.l.b16 %v140
    %v209 = vunpack.c.l.b16 %v141
    %v210 = vunpack.c.l.b16 %v142
    %v211 = vunpack.c.l.b16 %v143
    %v212 = vunpack.c.l.b16 %v144
    %v213 = vunpack.c.l.b16 %v145
    %v214 = vunpack.c.l.b16 %v146
    %v215 = vunpack.c.l.b16 %v147
    %v216 = vunpack.c.l.b16 %v148
    %v217 = vpack.c.b16 %v186, %v185
    %v218 = vpack.c.b16 %v188, %v187
    %v219 = vpack.c.b16 %v190, %v189
    %v220 = vpack.c.b16 %v192, %v191
    %v221 = vpack.c.b16 %v194, %v193
    %v222 = vpack.c.b16 %v196, %v195
    %v223 = vpack.c.b16 %v198, %v197
    %v224 = vpack.c.b16 %v200, %v199
    %v225 = vpack.c.b16 %v202, %v201
    %v226 = vpack.c.b16 %v204, %v203
    %v227 = vpack.c.b16 %v206, %v205
    %v228 = vpack.c.b16 %v208, %v207
    %v229 = vpack.c.b16 %v210, %v209
    %v230 = vpack.c.b16 %v212, %v211
    %v231 = vpack.c.b16 %v214, %v213
    %v232 = vpack.c.b16 %v216, %v215
    %249 = vmatpush.bf16.msra.mxu0 %v224
    %250 = vmatpush.bf16.msra.mxu0 %v223
    %251 = vmatpush.bf16.msra.mxu0 %v222
    %252 = vmatpush.bf16.msra.mxu0 %v221
    %253 = vmatpush.bf16.msra.mxu0 %v220
    %254 = vmatpush.bf16.msra.mxu0 %v219
    %255 = vmatpush.bf16.msra.mxu0 %v218
    %256 = vmatpush.bf16.msra.mxu0 %v217
    %257 = vmatmul.bf16.gmra.mxu0 %v115
    %v258 = vpop.f32.mrf.mxu0
    %v259 = vadd.f32 %v151, %v258
    %v260 = vpop.f32.mrf.mxu0
    %v261 = vadd.f32 %v151, %v260
    %262 = vdwg.mxu0
    %263 = vmatpush.bf16.msra.mxu0 %v232
    %264 = vmatpush.bf16.msra.mxu0 %v231
    %265 = vmatpush.bf16.msra.mxu0 %v230
    %266 = vmatpush.bf16.msra.mxu0 %v229
    %267 = vmatpush.bf16.msra.mxu0 %v228
    %268 = vmatpush.bf16.msra.mxu0 %v227
    %269 = vmatpush.bf16.msra.mxu0 %v226
    %270 = vmatpush.bf16.msra.mxu0 %v225
    %271 = vmatmul.bf16.gmra.mxu0 %v116
    %v272 = vpop.f32.mrf.mxu0
    %v273 = vadd.f32 %v259, %v272
    %v274 = vpop.f32.mrf.mxu0
    %v275 = vadd.f32 %v261, %v274
    %276 = vdwg.mxu0
    %v277 = vmax.f32 %v273, 0.0
    %v278 = vmax.f32 %v275, 0.0
    %v279 = vadd.f32 %v22, %v277
    %v280 = vadd.f32 %v23, %v278
    %281 = vst.msk [vmem:[#allocation2] sm:$0xff] %vm79, %v279
    %282 = vst.msk [vmem:[#allocation2 + $0x8] sm:$0xff] %vm79, %v280
    // Predicated region
    $region22: #{tpu_custom_call.1} parent=1 // pred_check
      _
    $region23: #{tpu_custom_call.1} parent=1 // pred_check_branch
      %284 = sbr.rel (0) target = $region25
    $region24: #{tpu_custom_call.1} parent=1 // pred_region
      %286 = vsyncadd [#allocation3], 0
      %s287 = sshll.u32 [#allocation2], 4
      %s288 = int_to_ptr.vmem [resolvable:$true] %s287
      %s289 = sshll.u32 %s5, 4
      %s290 = int_to_ptr.hbm [resolvable:$true] %s289
      %295 = dma.vmem_to_hbm [thread:$0]  %s288, 256, %s290, [#allocation3], 128, 128, 8
    $region25: #{tpu_custom_call.1} parent=1 // pred_fallthru
      _
    // Predicated region
    $region26: #{tpu_custom_call.1} parent=1 // pred_check
      _
    $region27: #{tpu_custom_call.1} parent=1 // pred_check_branch
      %297 = sbr.rel (0) target = $region29
    $region28: #{tpu_custom_call.1} parent=1 // pred_region
      %299 = dma.done [#allocation3], 256
    $region29: #{tpu_custom_call.1} parent=1 // pred_fallthru
      _
    %300 = vsyncpa [#allocation3], 1

</llo_original>
